<compile_context>
chip_gen: v6e
topology: v6e:2x2x1
jax: 0.10.0
libtpu: 0.0.40
codegen_flags: <defaults>
</compile_context>

<pallas_src>
import functools

import jax
import jax.numpy as jnp
from jax import lax
from jax.experimental import pallas as pl
from jax.experimental.pallas import tpu as pltpu


# ----------------------------- Pallas kernel --------------------------------

def _patch_embed_kernel(x_ref, w_ref, shift_ref, out_ref):
    # x_ref:     (M, K)  im2col rows, M = B*Ho*Wo, K = p*p*C (tap-major, c minor)
    # w_ref:     (K, E)  conv weight with BN scale folded in
    # shift_ref: (1, E)  folded conv-bias / BN shift
    # out_ref:   (M, E)
    y = jnp.dot(x_ref[...], w_ref[...], preferred_element_type=jnp.float32)
    out_ref[...] = jnp.maximum(y + shift_ref[...], 0.0).astype(out_ref.dtype)


@functools.partial(jax.jit, static_argnames=("patch_size",))
def _patch_embed_forward(x, conv_w, conv_b, bn_gamma, bn_beta, bn_rmean, bn_rvar,
                         bn_eps, *, patch_size):
    """x: (B, C, H, W) f32 -> (B, (H-p+1)*(W-p+1), E) f32."""
    B, C, H, W = x.shape
    p = patch_size
    Ho, Wo = H - p + 1, W - p + 1
    E = conv_w.shape[0]
    K = p * p * C
    M = B * Ho * Wo

    # --- host-side im2col (tap-major K ordering: k = (di*p + dj)*C + c) -------
    # ~56 KB total at these shapes; under jit the transpose + slices + concat
    # collapse into one fusion that allow_input_fusion feeds straight into the
    # pallas_call operand.
    x_nhwc = jnp.transpose(x, (0, 2, 3, 1))                          # (B, H, W, C)
    taps = [x_nhwc[:, di:di + Ho, dj:dj + Wo, :]
            for di in range(p) for dj in range(p)]
    x_col = jnp.concatenate(taps, axis=-1).reshape(M, K)             # (M, K)

    # --- fold BN (eval) into the GEMM: y = (x*W + b - rmean) * scale + beta ---
    scale = bn_gamma / jnp.sqrt(bn_rvar + bn_eps)                    # (E,)
    shift = ((conv_b - bn_rmean) * scale + bn_beta).reshape(1, E)    # (1, E)
    # conv_w: (E, C, p, p) -> (p, p, C, E) -> (K, E) so k = (di*p + dj)*C + c.
    w_col = jnp.transpose(conv_w * scale[:, None, None, None],
                          (2, 3, 1, 0)).reshape(K, E)

    out = pl.pallas_call(
        _patch_embed_kernel,
        out_shape=jax.ShapeDtypeStruct((M, E), jnp.float32),
        # No grid / no BlockSpecs: whole arrays (well under VMEM) in one step;
        # block == full array so the (8,128) divisibility rule is satisfied.
        compiler_params=pltpu.CompilerParams(
            allow_input_fusion=[True, True, True]),
        cost_estimate=pl.CostEstimate(
            flops=2 * M * K * E,
            transcendentals=0,
            bytes_accessed=4 * (M * K + K * E + E + M * E)),
    )(x_col, w_col, shift)

    return out.reshape(B, Ho * Wo, E)


# ------------------------------- module --------------------------------------

class PatchEmbedPallas:
    def __init__(self, board_size=16, patch_size=3, in_c=4, embed_dim=32, *, key):
        self.board_size = board_size
        self.patch_size = patch_size
        self.in_c = in_c
        self.embed_dim = embed_dim
        self.num_patches = (board_size - patch_size + 1) ** 2

        k_w, k_b, k_g, k_beta, k_rm, k_rv = jax.random.split(key, 6)
        fan_in = in_c * patch_size * patch_size
        bound = 1.0 / (fan_in ** 0.5)
        # Conv2d params (PyTorch weight layout: (E, C, p, p)).
        self.conv_w = jax.random.uniform(
            k_w, (embed_dim, in_c, patch_size, patch_size),
            minval=-bound, maxval=bound, dtype=jnp.float32)
        self.conv_b = jax.random.uniform(
            k_b, (embed_dim,), minval=-bound, maxval=bound, dtype=jnp.float32)
        # BatchNorm2d params + (deterministic, non-trivial) running stats.
        self.bn_gamma = 1.0 + 0.1 * jax.random.normal(k_g, (embed_dim,), jnp.float32)
        self.bn_beta = 0.1 * jax.random.normal(k_beta, (embed_dim,), jnp.float32)
        self.bn_rmean = 0.05 * jax.random.normal(k_rm, (embed_dim,), jnp.float32)
        self.bn_rvar = 1.0 + 0.1 * jax.random.uniform(k_rv, (embed_dim,), jnp.float32)
        self.bn_eps = 1e-5

    def __call__(self, x):
        B, C, H, W = x.shape
        assert H == self.board_size and W == self.board_size, (
            f"Input Board size ({H}*{W}) doesn't match model "
            f"({self.board_size}*{self.board_size}).")
        return _patch_embed_forward(
            x, self.conv_w, self.conv_b, self.bn_gamma, self.bn_beta,
            self.bn_rmean, self.bn_rvar, self.bn_eps, patch_size=self.patch_size)

    # Independent reference path (lax.conv) for verification.
    def reference(self, x):
        y = lax.conv_general_dilated(
            x, self.conv_w, window_strides=(1, 1), padding="VALID",
            dimension_numbers=("NCHW", "OIHW", "NCHW"))
        y = y + self.conv_b.reshape(1, -1, 1, 1)
        scale = (self.bn_gamma / jnp.sqrt(self.bn_rvar + self.bn_eps)).reshape(1, -1, 1, 1)
        shift = (self.bn_beta - self.bn_rmean *
                 (self.bn_gamma / jnp.sqrt(self.bn_rvar + self.bn_eps))).reshape(1, -1, 1, 1)
        y = jnp.maximum(y * scale + shift, 0.0)
        B, E, Ho, Wo = y.shape
        return y.reshape(B, E, Ho * Wo).transpose(0, 2, 1)


if __name__ == "__main__":
    key = jax.random.PRNGKey(0)
    k_param, k_x = jax.random.split(key)

    B, C, S = 2, 4, 16            # batch=2, in_c=4, board_size=16 (small shapes)
    module = PatchEmbedPallas(board_size=S, patch_size=3, in_c=C, embed_dim=32,
                              key=k_param)

    x = jax.random.normal(k_x, (B, C, S, S), dtype=jnp.float32)

    out = jax.block_until_ready(module(x))
    ref = jax.block_until_ready(module.reference(x))

    assert out.shape == (B, module.num_patches, module.embed_dim), out.shape
    assert jnp.allclose(out, ref, atol=1e-4, rtol=1e-4), float(jnp.max(jnp.abs(out - ref)))

    print("KERNEL_OK")
</pallas_src>

<mosaic_0001>
module attributes {stable_mosaic.version = 11 : i64} {
  func.func @_patch_embed_kernel(%arg0: memref<392x36xf32, #tpu.memory_space<vmem>>, %arg1: memref<36x32xf32, #tpu.memory_space<vmem>>, %arg2: memref<1x32xf32, #tpu.memory_space<vmem>>, %arg3: memref<392x32xf32, #tpu.memory_space<vmem>>) attributes {dimension_semantics = [], scalar_prefetch = 0 : i64, scratch_operands = 0 : i64, tpu.core_type = #tpu.core_type<tc>} {
    %c0 = arith.constant 0 : index
    %c0_0 = arith.constant 0 : index
    %0 = vector.load %arg0[%c0, %c0_0] : memref<392x36xf32, #tpu.memory_space<vmem>>, vector<392x36xf32>
    %c0_1 = arith.constant 0 : index
    %c0_2 = arith.constant 0 : index
    %1 = vector.load %arg1[%c0_1, %c0_2] : memref<36x32xf32, #tpu.memory_space<vmem>>, vector<36x32xf32>
    %cst = arith.constant dense<0.000000e+00> : vector<392x32xf32>
    %2 = tpu.matmul %0, %1, %cst {dimension_numbers = #tpu.dot_dimension_numbers<[1], [0], [0], [1], [0, 0, 1, 1], [], []>} : vector<392x36xf32>, vector<36x32xf32>, vector<392x32xf32> -> vector<392x32xf32>
    %c0_3 = arith.constant 0 : index
    %c0_4 = arith.constant 0 : index
    %3 = vector.load %arg2[%c0_3, %c0_4] : memref<1x32xf32, #tpu.memory_space<vmem>>, vector<1x32xf32>
    %4 = vector.broadcast %3 : vector<1x32xf32> to vector<392x32xf32>
    %5 = arith.addf %2, %4 : vector<392x32xf32>
    %cst_5 = arith.constant 0.000000e+00 : f32
    %6 = vector.broadcast %cst_5 : f32 to vector<392x32xf32>
    %7 = arith.maximumf %5, %6 : vector<392x32xf32>
    %c0_6 = arith.constant 0 : index
    %c0_7 = arith.constant 0 : index
    %8 = vector.load %arg3[%c0_6, %c0_7] : memref<392x32xf32, #tpu.memory_space<vmem>>, vector<392x32xf32>
    tpu.vector_store %arg3[%c0_6, %c0_7], %7 {strides = array<i32>} : memref<392x32xf32, #tpu.memory_space<vmem>>, vector<392x32xf32>,
    return
  }
}

</mosaic_0001>

<llo_original>
// kernel: _patch_embed_forward.2
$region0: #{_patch_embed_forward.2}
  #allocation0 [shape = 'u32[]', space=smem, size = 0x4, offset = 0x4, fixed_abs, tag = 'smem constant byte address 0x4 - core index']
  #allocation1 [shape = 'u32[144,128]{1,0:T(1,128)}', space=vmem, size = 0x12000, scoped, tag = 'internal scratch']
  %s0 = inlined_call_operand.vmem [shape: f32[392,36], index: 0, kind: input, shape index: {}]
  %s1 = inlined_call_operand.vmem [shape: f32[36,32], index: 1, kind: input, shape index: {}]
  %s2 = inlined_call_operand.vmem [shape: f32[32], index: 2, kind: input, shape index: {}]
  %s3 = inlined_call_operand.vmem [shape: f32[32], index: 3, kind: input, shape index: {}]
  %s4 = inlined_call_operand.vmem [shape: f32[32], index: 4, kind: input, shape index: {}]
  %s5 = inlined_call_operand.vmem [shape: f32[32], index: 5, kind: input, shape index: {}]
  %s6 = inlined_call_operand.vmem [shape: f32[392,32], index: 6, kind: output, shape index: {}]
  %s7 = sld [smem:[#allocation0]]
  $region34: #{_patch_embed_forward.2} parent=0
    _
  %s9 = ssub.s32 1, %s7
  %s10 = scalar_select 0, %s9, %s7
  $region1: #{_patch_embed_forward.2} parent=0
    #allocation2 [shape = 'u8[512]{0}', space=vmem, size = 0x400, dematerialized = true, scoped, tag = 'FusionAdapter Buffer %fusion.1 = f32[1,32]{1,0:T(1,128)} fusion(%param_2.3, %param_3.2, %param_4.1, %param_5), kind=kLoop, calls=%fused_computation.2.clone, metadata={op_name="jit(_patch_embed_forward)/reshape" stack_frame_id=16}']
    // Predicated region
    $region2: #{_patch_embed_forward.2} parent=1 // pred_check
      _
    $region3: #{_patch_embed_forward.2} parent=1 // pred_check_branch
      %12 = sbr.rel (0) target = $region5
    $region4: #{_patch_embed_forward.2} parent=1 // pred_region
      _
    $region5: #{_patch_embed_forward.2} parent=1 // pred_fallthru
      _
    // Predicated region
    $region6: #{_patch_embed_forward.2} parent=1 // pred_check
      _
    $region7: #{_patch_embed_forward.2} parent=1 // pred_check_branch
      %14 = sbr.rel (0) target = $region9
    $region8: #{_patch_embed_forward.2} parent=1 // pred_region
      _
    $region9: #{_patch_embed_forward.2} parent=1 // pred_fallthru
      _
    // Predicated region
    $region10: #{_patch_embed_forward.2} parent=1 // pred_check
      _
    $region11: #{_patch_embed_forward.2} parent=1 // pred_check_branch
      %16 = sbr.rel (0) target = $region13
    $region12: #{_patch_embed_forward.2} parent=1 // pred_region
      _
    $region13: #{_patch_embed_forward.2} parent=1 // pred_fallthru
      _
    // Predicated region
    $region14: #{_patch_embed_forward.2} parent=1 // pred_check
      _
    $region15: #{_patch_embed_forward.2} parent=1 // pred_check_branch
      %18 = sbr.rel (0) target = $region17
    $region16: #{_patch_embed_forward.2} parent=1 // pred_region
      _
    $region17: #{_patch_embed_forward.2} parent=1 // pred_fallthru
      _
    // Predicated region
    $region18: #{_patch_embed_forward.2} parent=1 // pred_check
      _
    $region19: #{_patch_embed_forward.2} parent=1 // pred_check_branch
      %20 = sbr.rel (0) target = $region21
    $region20: #{_patch_embed_forward.2} parent=1 // pred_region
      _
    $region21: #{_patch_embed_forward.2} parent=1 // pred_fallthru
      _
    // Predicated region
    $region22: #{_patch_embed_forward.2} parent=1 // pred_check
      _
    $region23: #{_patch_embed_forward.2} parent=1 // pred_check_branch
      %22 = sbr.rel (0) target = $region25
    $region24: #{_patch_embed_forward.2} parent=1 // pred_region
      _
    $region25: #{_patch_embed_forward.2} parent=1 // pred_fallthru
      _
    %v23 = vld [vmem:[%s2] sm:$0x1]
    %v24 = vld [vmem:[%s3] sm:$0x1]
    %v25 = vld [vmem:[%s4] sm:$0x1]
    %v26 = vld [vmem:[%s5] sm:$0x1]
    %27 = xla_tuple %v25, %v26
    %28 = xla_tuple %27
    %v29 = vsub.f32 %v25, %v26
    %30 = xla_tuple %v29
    %31 = xla_tuple %v29, %v24
    %32 = xla_tuple %31
    %v33 = vmul.f32 %v29, %v24
    %34 = xla_tuple %v33
    %35 = xla_tuple %v33, %v23
    %36 = xla_tuple %35
    %v37 = vadd.f32 %v33, %v23
    %38 = xla_tuple %v37
    %s40 = ssub.s32 2, 1
    %41 = vst [vmem:[#allocation2] sm:%s40] %v37
    %v42 = vld [vmem:[%s0] sm:$0xff]
    %v43 = vld [vmem:[%s0 + $0x8] sm:$0xff]
    %v44 = vld [vmem:[%s0 + $0x10] sm:$0xff]
    %v45 = vld [vmem:[%s0 + $0x18] sm:$0xff]
    %v46 = vld [vmem:[%s0 + $0x20] sm:$0xff]
    %v47 = vld [vmem:[%s0 + $0x28] sm:$0xff]
    %v48 = vld [vmem:[%s0 + $0x30] sm:$0xff]
    %v49 = vld [vmem:[%s0 + $0x38] sm:$0xff]
    %v50 = vld [vmem:[%s0 + $0x40] sm:$0xff]
    %v51 = vld [vmem:[%s0 + $0x48] sm:$0xff]
    %v52 = vld [vmem:[%s0 + $0x50] sm:$0xff]
    %v53 = vld [vmem:[%s0 + $0x58] sm:$0xff]
    %v54 = vld [vmem:[%s0 + $0x60] sm:$0xff]
    %v55 = vld [vmem:[%s0 + $0x68] sm:$0xff]
    %v56 = vld [vmem:[%s0 + $0x70] sm:$0xff]
    %v57 = vld [vmem:[%s0 + $0x78] sm:$0xff]
    %v58 = vld [vmem:[%s0 + $0x80] sm:$0xff]
    %v59 = vld [vmem:[%s0 + $0x88] sm:$0xff]
    %v60 = vld [vmem:[%s0 + $0x90] sm:$0xff]
    %v61 = vld [vmem:[%s0 + $0x98] sm:$0xff]
    %v62 = vld [vmem:[%s0 + $0xa0] sm:$0xff]
    %v63 = vld [vmem:[%s0 + $0xa8] sm:$0xff]
    %v64 = vld [vmem:[%s0 + $0xb0] sm:$0xff]
    %v65 = vld [vmem:[%s0 + $0xb8] sm:$0xff]
    %v66 = vld [vmem:[%s0 + $0xc0] sm:$0xff]
    %v67 = vld [vmem:[%s0 + $0xc8] sm:$0xff]
    %v68 = vld [vmem:[%s0 + $0xd0] sm:$0xff]
    %v69 = vld [vmem:[%s0 + $0xd8] sm:$0xff]
    %v70 = vld [vmem:[%s0 + $0xe0] sm:$0xff]
    %v71 = vld [vmem:[%s0 + $0xe8] sm:$0xff]
    %v72 = vld [vmem:[%s0 + $0xf0] sm:$0xff]
    %v73 = vld [vmem:[%s0 + $0xf8] sm:$0xff]
    %v74 = vld [vmem:[%s0 + $0x100] sm:$0xff]
    %v75 = vld [vmem:[%s0 + $0x108] sm:$0xff]
    %v76 = vld [vmem:[%s0 + $0x110] sm:$0xff]
    %v77 = vld [vmem:[%s0 + $0x118] sm:$0xff]
    %v78 = vld [vmem:[%s0 + $0x120] sm:$0xff]
    %v79 = vld [vmem:[%s0 + $0x128] sm:$0xff]
    %v80 = vld [vmem:[%s0 + $0x130] sm:$0xff]
    %v81 = vld [vmem:[%s0 + $0x138] sm:$0xff]
    %v82 = vld [vmem:[%s0 + $0x140] sm:$0xff]
    %v83 = vld [vmem:[%s0 + $0x148] sm:$0xff]
    %v84 = vld [vmem:[%s0 + $0x150] sm:$0xff]
    %v85 = vld [vmem:[%s0 + $0x158] sm:$0xff]
    %v86 = vld [vmem:[%s0 + $0x160] sm:$0xff]
    %v87 = vld [vmem:[%s0 + $0x168] sm:$0xff]
    %v88 = vld [vmem:[%s0 + $0x170] sm:$0xff]
    %v89 = vld [vmem:[%s0 + $0x178] sm:$0xff]
    %v90 = vld [vmem:[%s0 + $0x180] sm:$0xff]
    %v91 = vld [vmem:[%s1] sm:$0xff]
    %v92 = vld [vmem:[%s1 + $0x8] sm:$0xff]
    %v93 = vld [vmem:[%s1 + $0x10] sm:$0xff]
    %v94 = vld [vmem:[%s1 + $0x18] sm:$0xff]
    %v95 = vld [vmem:[%s1 + $0x20] sm:$0xf]
    %v96 = vld [vmem:[#allocation2] sm:$0x1]
    %v98 = vlaneseq
    %v99 = vshrl.u32 %v98, 7
    %v100 = vsub.s32 0, %v99
    %v101 = vrot.slane %v96, %v100
    %vm103 = vcmask 293888
    %v105 = vsel %vm103, %v42, 0
    %v108 = vsel %vm103, %v43, 0
    %v111 = vsel %vm103, %v44, 0
    %v114 = vsel %vm103, %v45, 0
    %v117 = vsel %vm103, %v46, 0
    %v120 = vsel %vm103, %v47, 0
    %v123 = vsel %vm103, %v48, 0
    %v126 = vsel %vm103, %v49, 0
    %v129 = vsel %vm103, %v50, 0
    %v132 = vsel %vm103, %v51, 0
    %v135 = vsel %vm103, %v52, 0
    %v138 = vsel %vm103, %v53, 0
    %v141 = vsel %vm103, %v54, 0
    %v144 = vsel %vm103, %v55, 0
    %v147 = vsel %vm103, %v56, 0
    %v150 = vsel %vm103, %v57, 0
    %v153 = vsel %vm103, %v58, 0
    %v156 = vsel %vm103, %v59, 0
    %v159 = vsel %vm103, %v60, 0
    %v162 = vsel %vm103, %v61, 0
    %v165 = vsel %vm103, %v62, 0
    %v168 = vsel %vm103, %v63, 0
    %v171 = vsel %vm103, %v64, 0
    %v174 = vsel %vm103, %v65, 0
    %v177 = vsel %vm103, %v66, 0
    %v180 = vsel %vm103, %v67, 0
    %v183 = vsel %vm103, %v68, 0
    %v186 = vsel %vm103, %v69, 0
    %v189 = vsel %vm103, %v70, 0
    %v192 = vsel %vm103, %v71, 0
    %v195 = vsel %vm103, %v72, 0
    %v198 = vsel %vm103, %v73, 0
    %v201 = vsel %vm103, %v74, 0
    %v204 = vsel %vm103, %v75, 0
    %v207 = vsel %vm103, %v76, 0
    %v210 = vsel %vm103, %v77, 0
    %v213 = vsel %vm103, %v78, 0
    %v216 = vsel %vm103, %v79, 0
    %v219 = vsel %vm103, %v80, 0
    %v222 = vsel %vm103, %v81, 0
    %v225 = vsel %vm103, %v82, 0
    %v228 = vsel %vm103, %v83, 0
    %v231 = vsel %vm103, %v84, 0
    %v234 = vsel %vm103, %v85, 0
    %v237 = vsel %vm103, %v86, 0
    %v240 = vsel %vm103, %v87, 0
    %v243 = vsel %vm103, %v88, 0
    %v246 = vsel %vm103, %v89, 0
    %v249 = vsel %vm103, %v90, 0
    %vm251 = vcmask 1043456
    %v253 = vsel %vm251, %v95, 0
    %255 = vmatprep.subr.mxu0 0.0
    %256 = vmatpush1.msra.mxu0 0.0
    %257 = vmatprep.subr.mxu0 0.0
    %258 = vmatpush1.msra.mxu0 0.0
    %259 = vmatprep.subr.mxu0 0.0
    %260 = vmatpush1.msra.mxu0 0.0
    %261 = vmatprep.subr.mxu0 0.0
    %262 = vmatpush1.msra.mxu0 0.0
    %263 = vmatprep.subr.mxu0 0.0
    %264 = vmatpush1.msra.mxu0 0.0
    %265 = vmatprep.subr.mxu0 0.0
    %266 = vmatpush1.msra.mxu0 0.0
    %267 = vmatprep.subr.mxu0 0.0
    %268 = vmatpush1.msra.mxu0 0.0
    %269 = vmatprep.subr.mxu0 0.0
    %270 = vmatpush1.msra.mxu0 0.0
    %271 = vmatprep.subr.mxu0 0.0
    %272 = vmatpush1.msra.mxu0 0.0
    %273 = vmatprep.subr.mxu0 0.0
    %274 = vmatpush1.msra.mxu0 0.0
    %275 = vmatprep.subr.mxu0 0.0
    %276 = vmatpush1.msra.mxu0 0.0
    %277 = vmatprep.subr.mxu0 0.0
    %278 = vmatpush1.msra.mxu0 %v253
    %279 = vmatprep.subr.mxu0 0.0
    %280 = vmatpush1.msra.mxu0 %v94
    %281 = vmatprep.subr.mxu0 0.0
    %282 = vmatpush1.msra.mxu0 %v93
    %283 = vmatprep.subr.mxu0 0.0
    %284 = vmatpush1.msra.mxu0 %v92
    %285 = vmatprep.subr.mxu0 0.0
    %286 = vmatpush1.msra.mxu0 %v91
    %287 = vmatprep.subr.mxu0 0.0
    %288 = vmatpush2.msra.mxu0 0.0
    %289 = vmatprep.subr.mxu0 0.0
    %290 = vmatpush2.msra.mxu0 0.0
    %291 = vmatprep.subr.mxu0 0.0
    %292 = vmatpush2.msra.mxu0 0.0
    %293 = vmatprep.subr.mxu0 0.0
    %294 = vmatpush2.msra.mxu0 0.0
    %295 = vmatprep.subr.mxu0 0.0
    %296 = vmatpush2.msra.mxu0 0.0
    %297 = vmatprep.subr.mxu0 0.0
    %298 = vmatpush2.msra.mxu0 0.0
    %299 = vmatprep.subr.mxu0 0.0
    %300 = vmatpush2.msra.mxu0 0.0
    %301 = vmatprep.subr.mxu0 0.0
    %302 = vmatpush2.msra.mxu0 0.0
    %303 = vmatprep.subr.mxu0 0.0
    %304 = vmatpush2.msra.mxu0 0.0
    %305 = vmatprep.subr.mxu0 0.0
    %306 = vmatpush2.msra.mxu0 0.0
    %307 = vmatprep.subr.mxu0 0.0
    %308 = vmatpush2.msra.mxu0 0.0
    %309 = vmatprep.subr.mxu0 0.0
    %310 = vmatpush2.msra.mxu0 0.0
    %311 = vmatprep.subr.mxu0 0.0
    %312 = vmatpush2.msra.mxu0 0.0
    %313 = vmatprep.subr.mxu0 0.0
    %314 = vmatpush2.msra.mxu0 0.0
    %315 = vmatprep.subr.mxu0 0.0
    %316 = vmatpush2.msra.mxu0 0.0
    %317 = vmatprep.subr.mxu0 0.0
    %318 = vmatpush2.msra.mxu0 0.0
    %319 = vmatprep.mubr.f32.mxu0 0.0
    %320 = vmatmul.mubr.f32.gmra.mxu0 %v105
    %v321 = vpop.f32.mrf.mxu0
    %v322 = vadd.f32 %v101, %v321
    %v323 = vpop.f32.mrf.mxu0
    %324 = vmatprep.mubr.f32.mxu0 0.0
    %325 = vmatmul.mubr.f32.gmra.mxu0 %v108
    %v326 = vpop.f32.mrf.mxu0
    %v327 = vadd.f32 %v101, %v326
    %v328 = vpop.f32.mrf.mxu0
    %329 = vmatprep.mubr.f32.mxu0 0.0
    %330 = vmatmul.mubr.f32.gmra.mxu0 %v111
    %v331 = vpop.f32.mrf.mxu0
    %v332 = vadd.f32 %v101, %v331
    %v333 = vpop.f32.mrf.mxu0
    %334 = vmatprep.mubr.f32.mxu0 0.0
    %335 = vmatmul.mubr.f32.gmra.mxu0 %v114
    %v336 = vpop.f32.mrf.mxu0
    %v337 = vadd.f32 %v101, %v336
    %v338 = vpop.f32.mrf.mxu0
    %339 = vmatprep.mubr.f32.mxu0 0.0
    %340 = vmatmul.mubr.f32.gmra.mxu0 %v117
    %v341 = vpop.f32.mrf.mxu0
    %v342 = vadd.f32 %v101, %v341
    %v343 = vpop.f32.mrf.mxu0
    %344 = vmatprep.mubr.f32.mxu0 0.0
    %345 = vmatmul.mubr.f32.gmra.mxu0 %v120
    %v346 = vpop.f32.mrf.mxu0
    %v347 = vadd.f32 %v101, %v346
    %v348 = vpop.f32.mrf.mxu0
    %349 = vmatprep.mubr.f32.mxu0 0.0
    %350 = vmatmul.mubr.f32.gmra.mxu0 %v123
    %v351 = vpop.f32.mrf.mxu0
    %v352 = vadd.f32 %v101, %v351
    %v353 = vpop.f32.mrf.mxu0
    %354 = vmatprep.mubr.f32.mxu0 0.0
    %355 = vmatmul.mubr.f32.gmra.mxu0 %v126
    %v356 = vpop.f32.mrf.mxu0
    %v357 = vadd.f32 %v101, %v356
    %v358 = vpop.f32.mrf.mxu0
    %359 = vmatprep.mubr.f32.mxu0 0.0
    %360 = vmatmul.mubr.f32.gmra.mxu0 %v129
    %v361 = vpop.f32.mrf.mxu0
    %v362 = vadd.f32 %v101, %v361
    %v363 = vpop.f32.mrf.mxu0
    %364 = vmatprep.mubr.f32.mxu0 0.0
    %365 = vmatmul.mubr.f32.gmra.mxu0 %v132
    %v366 = vpop.f32.mrf.mxu0
    %v367 = vadd.f32 %v101, %v366
    %v368 = vpop.f32.mrf.mxu0
    %369 = vmatprep.mubr.f32.mxu0 0.0
    %370 = vmatmul.mubr.f32.gmra.mxu0 %v135
    %v371 = vpop.f32.mrf.mxu0
    %v372 = vadd.f32 %v101, %v371
    %v373 = vpop.f32.mrf.mxu0
    %374 = vmatprep.mubr.f32.mxu0 0.0
    %375 = vmatmul.mubr.f32.gmra.mxu0 %v138
    %v376 = vpop.f32.mrf.mxu0
    %v377 = vadd.f32 %v101, %v376
    %v378 = vpop.f32.mrf.mxu0
    %379 = vmatprep.mubr.f32.mxu0 0.0
    %380 = vmatmul.mubr.f32.gmra.mxu0 %v141
    %v381 = vpop.f32.mrf.mxu0
    %v382 = vadd.f32 %v101, %v381
    %v383 = vpop.f32.mrf.mxu0
    %384 = vmatprep.mubr.f32.mxu0 0.0
    %385 = vmatmul.mubr.f32.gmra.mxu0 %v144
    %v386 = vpop.f32.mrf.mxu0
    %v387 = vadd.f32 %v101, %v386
    %v388 = vpop.f32.mrf.mxu0
    %389 = vmatprep.mubr.f32.mxu0 0.0
    %390 = vmatmul.mubr.f32.gmra.mxu0 %v147
    %v391 = vpop.f32.mrf.mxu0
    %v392 = vadd.f32 %v101, %v391
    %v393 = vpop.f32.mrf.mxu0
    %394 = vmatprep.mubr.f32.mxu0 0.0
    %395 = vmatmul.mubr.f32.gmra.mxu0 %v150
    %v396 = vpop.f32.mrf.mxu0
    %v397 = vadd.f32 %v101, %v396
    %v398 = vpop.f32.mrf.mxu0
    %399 = vmatprep.mubr.f32.mxu0 0.0
    %400 = vmatmul.mubr.f32.gmra.mxu0 %v153
    %v401 = vpop.f32.mrf.mxu0
    %v402 = vadd.f32 %v101, %v401
    %v403 = vpop.f32.mrf.mxu0
    %404 = vmatprep.mubr.f32.mxu0 0.0
    %405 = vmatmul.mubr.f32.gmra.mxu0 %v156
    %v406 = vpop.f32.mrf.mxu0
    %v407 = vadd.f32 %v101, %v406
    %v408 = vpop.f32.mrf.mxu0
    %409 = vmatprep.mubr.f32.mxu0 0.0
    %410 = vmatmul.mubr.f32.gmra.mxu0 %v159
    %v411 = vpop.f32.mrf.mxu0
    %v412 = vadd.f32 %v101, %v411
    %v413 = vpop.f32.mrf.mxu0
    %414 = vmatprep.mubr.f32.mxu0 0.0
    %415 = vmatmul.mubr.f32.gmra.mxu0 %v162
    %v416 = vpop.f32.mrf.mxu0
    %v417 = vadd.f32 %v101, %v416
    %v418 = vpop.f32.mrf.mxu0
    %419 = vmatprep.mubr.f32.mxu0 0.0
    %420 = vmatmul.mubr.f32.gmra.mxu0 %v165
    %v421 = vpop.f32.mrf.mxu0
    %v422 = vadd.f32 %v101, %v421
    %v423 = vpop.f32.mrf.mxu0
    %424 = vmatprep.mubr.f32.mxu0 0.0
    %425 = vmatmul.mubr.f32.gmra.mxu0 %v168
    %v426 = vpop.f32.mrf.mxu0
    %v427 = vadd.f32 %v101, %v426
    %v428 = vpop.f32.mrf.mxu0
    %429 = vmatprep.mubr.f32.mxu0 0.0
    %430 = vmatmul.mubr.f32.gmra.mxu0 %v171
    %v431 = vpop.f32.mrf.mxu0
    %v432 = vadd.f32 %v101, %v431
    %v433 = vpop.f32.mrf.mxu0
    %434 = vmatprep.mubr.f32.mxu0 0.0
    %435 = vmatmul.mubr.f32.gmra.mxu0 %v174
    %v436 = vpop.f32.mrf.mxu0
    %v437 = vadd.f32 %v101, %v436
    %v438 = vpop.f32.mrf.mxu0
    %439 = vmatprep.mubr.f32.mxu0 0.0
    %440 = vmatmul.mubr.f32.gmra.mxu0 %v177
    %v441 = vpop.f32.mrf.mxu0
    %v442 = vadd.f32 %v101, %v441
    %v443 = vpop.f32.mrf.mxu0
    %444 = vmatprep.mubr.f32.mxu0 0.0
    %445 = vmatmul.mubr.f32.gmra.mxu0 %v180
    %v446 = vpop.f32.mrf.mxu0
    %v447 = vadd.f32 %v101, %v446
    %v448 = vpop.f32.mrf.mxu0
    %449 = vmatprep.mubr.f32.mxu0 0.0
    %450 = vmatmul.mubr.f32.gmra.mxu0 %v183
    %v451 = vpop.f32.mrf.mxu0
    %v452 = vadd.f32 %v101, %v451
    %v453 = vpop.f32.mrf.mxu0
    %454 = vmatprep.mubr.f32.mxu0 0.0
    %455 = vmatmul.mubr.f32.gmra.mxu0 %v186
    %v456 = vpop.f32.mrf.mxu0
    %v457 = vadd.f32 %v101, %v456
    %v458 = vpop.f32.mrf.mxu0
    %459 = vmatprep.mubr.f32.mxu0 0.0
    %460 = vmatmul.mubr.f32.gmra.mxu0 %v189
    %v461 = vpop.f32.mrf.mxu0
    %v462 = vadd.f32 %v101, %v461
    %v463 = vpop.f32.mrf.mxu0
    %464 = vmatprep.mubr.f32.mxu0 0.0
    %465 = vmatmul.mubr.f32.gmra.mxu0 %v192
    %v466 = vpop.f32.mrf.mxu0
    %v467 = vadd.f32 %v101, %v466
    %v468 = vpop.f32.mrf.mxu0
    %469 = vmatprep.mubr.f32.mxu0 0.0
    %470 = vmatmul.mubr.f32.gmra.mxu0 %v195
    %v471 = vpop.f32.mrf.mxu0
    %v472 = vadd.f32 %v101, %v471
    %v473 = vpop.f32.mrf.mxu0
    %474 = vmatprep.mubr.f32.mxu0 0.0
    %475 = vmatmul.mubr.f32.gmra.mxu0 %v198
    %v476 = vpop.f32.mrf.mxu0
    %v477 = vadd.f32 %v101, %v476
    %v478 = vpop.f32.mrf.mxu0
    %479 = vmatprep.mubr.f32.mxu0 0.0
    %480 = vmatmul.mubr.f32.gmra.mxu0 %v201
    %v481 = vpop.f32.mrf.mxu0
    %v482 = vadd.f32 %v101, %v481
    %v483 = vpop.f32.mrf.mxu0
    %484 = vmatprep.mubr.f32.mxu0 0.0
    %485 = vmatmul.mubr.f32.gmra.mxu0 %v204
    %v486 = vpop.f32.mrf.mxu0
    %v487 = vadd.f32 %v101, %v486
    %v488 = vpop.f32.mrf.mxu0
    %489 = vmatprep.mubr.f32.mxu0 0.0
    %490 = vmatmul.mubr.f32.gmra.mxu0 %v207
    %v491 = vpop.f32.mrf.mxu0
    %v492 = vadd.f32 %v101, %v491
    %v493 = vpop.f32.mrf.mxu0
    %494 = vmatprep.mubr.f32.mxu0 0.0
    %495 = vmatmul.mubr.f32.gmra.mxu0 %v210
    %v496 = vpop.f32.mrf.mxu0
    %v497 = vadd.f32 %v101, %v496
    %v498 = vpop.f32.mrf.mxu0
    %499 = vmatprep.mubr.f32.mxu0 0.0
    %500 = vmatmul.mubr.f32.gmra.mxu0 %v213
    %v501 = vpop.f32.mrf.mxu0
    %v502 = vadd.f32 %v101, %v501
    %v503 = vpop.f32.mrf.mxu0
    %504 = vmatprep.mubr.f32.mxu0 0.0
    %505 = vmatmul.mubr.f32.gmra.mxu0 %v216
    %v506 = vpop.f32.mrf.mxu0
    %v507 = vadd.f32 %v101, %v506
    %v508 = vpop.f32.mrf.mxu0
    %509 = vmatprep.mubr.f32.mxu0 0.0
    %510 = vmatmul.mubr.f32.gmra.mxu0 %v219
    %v511 = vpop.f32.mrf.mxu0
    %v512 = vadd.f32 %v101, %v511
    %v513 = vpop.f32.mrf.mxu0
    %514 = vmatprep.mubr.f32.mxu0 0.0
    %515 = vmatmul.mubr.f32.gmra.mxu0 %v222
    %v516 = vpop.f32.mrf.mxu0
    %v517 = vadd.f32 %v101, %v516
    %v518 = vpop.f32.mrf.mxu0
    %519 = vmatprep.mubr.f32.mxu0 0.0
    %520 = vmatmul.mubr.f32.gmra.mxu0 %v225
    %v521 = vpop.f32.mrf.mxu0
    %v522 = vadd.f32 %v101, %v521
    %v523 = vpop.f32.mrf.mxu0
    %524 = vmatprep.mubr.f32.mxu0 0.0
    %525 = vmatmul.mubr.f32.gmra.mxu0 %v228
    %v526 = vpop.f32.mrf.mxu0
    %v527 = vadd.f32 %v101, %v526
    %v528 = vpop.f32.mrf.mxu0
    %529 = vmatprep.mubr.f32.mxu0 0.0
    %530 = vmatmul.mubr.f32.gmra.mxu0 %v231
    %v531 = vpop.f32.mrf.mxu0
    %v532 = vadd.f32 %v101, %v531
    %v533 = vpop.f32.mrf.mxu0
    %534 = vmatprep.mubr.f32.mxu0 0.0
    %535 = vmatmul.mubr.f32.gmra.mxu0 %v234
    %v536 = vpop.f32.mrf.mxu0
    %v537 = vadd.f32 %v101, %v536
    %v538 = vpop.f32.mrf.mxu0
    %539 = vmatprep.mubr.f32.mxu0 0.0
    %540 = vmatmul.mubr.f32.gmra.mxu0 %v237
    %v541 = vpop.f32.mrf.mxu0
    %v542 = vadd.f32 %v101, %v541
    %v543 = vpop.f32.mrf.mxu0
    %544 = vmatprep.mubr.f32.mxu0 0.0
    %545 = vmatmul.mubr.f32.gmra.mxu0 %v240
    %v546 = vpop.f32.mrf.mxu0
    %v547 = vadd.f32 %v101, %v546
    %v548 = vpop.f32.mrf.mxu0
    %549 = vmatprep.mubr.f32.mxu0 0.0
    %550 = vmatmul.mubr.f32.gmra.mxu0 %v243
    %v551 = vpop.f32.mrf.mxu0
    %v552 = vadd.f32 %v101, %v551
    %v553 = vpop.f32.mrf.mxu0
    %554 = vmatprep.mubr.f32.mxu0 0.0
    %555 = vmatmul.mubr.f32.gmra.mxu0 %v246
    %v556 = vpop.f32.mrf.mxu0
    %v557 = vadd.f32 %v101, %v556
    %v558 = vpop.f32.mrf.mxu0
    %559 = vmatprep.mubr.f32.mxu0 0.0
    %560 = vmatmul.mubr.f32.gmra.mxu0 %v249
    %v561 = vpop.f32.mrf.mxu0
    %v562 = vadd.f32 %v101, %v561
    %v563 = vpop.f32.mrf.mxu0
    %564 = vdwg.mxu0
    %v565 = vmax.f32 %v322, 0.0
    %v566 = vmax.f32 %v327, 0.0
    %v567 = vmax.f32 %v332, 0.0
    %v568 = vmax.f32 %v337, 0.0
    %v569 = vmax.f32 %v342, 0.0
    %v570 = vmax.f32 %v347, 0.0
    %v571 = vmax.f32 %v352, 0.0
    %v572 = vmax.f32 %v357, 0.0
    %v573 = vmax.f32 %v362, 0.0
    %v574 = vmax.f32 %v367, 0.0
    %v575 = vmax.f32 %v372, 0.0
    %v576 = vmax.f32 %v377, 0.0
    %v577 = vmax.f32 %v382, 0.0
    %v578 = vmax.f32 %v387, 0.0
    %v579 = vmax.f32 %v392, 0.0
    %v580 = vmax.f32 %v397, 0.0
    %v581 = vmax.f32 %v402, 0.0
    %v582 = vmax.f32 %v407, 0.0
    %v583 = vmax.f32 %v412, 0.0
    %v584 = vmax.f32 %v417, 0.0
    %v585 = vmax.f32 %v422, 0.0
    %v586 = vmax.f32 %v427, 0.0
    %v587 = vmax.f32 %v432, 0.0
    %v588 = vmax.f32 %v437, 0.0
    %v589 = vmax.f32 %v442, 0.0
    %v590 = vmax.f32 %v447, 0.0
    %v591 = vmax.f32 %v452, 0.0
    %v592 = vmax.f32 %v457, 0.0
    %v593 = vmax.f32 %v462, 0.0
    %v594 = vmax.f32 %v467, 0.0
    %v595 = vmax.f32 %v472, 0.0
    %v596 = vmax.f32 %v477, 0.0
    %v597 = vmax.f32 %v482, 0.0
    %v598 = vmax.f32 %v487, 0.0
    %v599 = vmax.f32 %v492, 0.0
    %v600 = vmax.f32 %v497, 0.0
    %v601 = vmax.f32 %v502, 0.0
    %v602 = vmax.f32 %v507, 0.0
    %v603 = vmax.f32 %v512, 0.0
    %v604 = vmax.f32 %v517, 0.0
    %v605 = vmax.f32 %v522, 0.0
    %v606 = vmax.f32 %v527, 0.0
    %v607 = vmax.f32 %v532, 0.0
    %v608 = vmax.f32 %v537, 0.0
    %v609 = vmax.f32 %v542, 0.0
    %v610 = vmax.f32 %v547, 0.0
    %v611 = vmax.f32 %v552, 0.0
    %v612 = vmax.f32 %v557, 0.0
    %v613 = vmax.f32 %v562, 0.0
    %vm614 = vcmask 261120
    %615 = vst.msk [vmem:[%s6] sm:$0xff] %vm614, %v565
    %616 = vst.msk [vmem:[%s6 + $0x8] sm:$0xff] %vm614, %v566
    %617 = vst.msk [vmem:[%s6 + $0x10] sm:$0xff] %vm614, %v567
    %618 = vst.msk [vmem:[%s6 + $0x18] sm:$0xff] %vm614, %v568
    %619 = vst.msk [vmem:[%s6 + $0x20] sm:$0xff] %vm614, %v569
    %620 = vst.msk [vmem:[%s6 + $0x28] sm:$0xff] %vm614, %v570
    %621 = vst.msk [vmem:[%s6 + $0x30] sm:$0xff] %vm614, %v571
    %622 = vst.msk [vmem:[%s6 + $0x38] sm:$0xff] %vm614, %v572
    %623 = vst.msk [vmem:[%s6 + $0x40] sm:$0xff] %vm614, %v573
    %624 = vst.msk [vmem:[%s6 + $0x48] sm:$0xff] %vm614, %v574
    %625 = vst.msk [vmem:[%s6 + $0x50] sm:$0xff] %vm614, %v575
    %626 = vst.msk [vmem:[%s6 + $0x58] sm:$0xff] %vm614, %v576
    %627 = vst.msk [vmem:[%s6 + $0x60] sm:$0xff] %vm614, %v577
    %628 = vst.msk [vmem:[%s6 + $0x68] sm:$0xff] %vm614, %v578
    %629 = vst.msk [vmem:[%s6 + $0x70] sm:$0xff] %vm614, %v579
    %630 = vst.msk [vmem:[%s6 + $0x78] sm:$0xff] %vm614, %v580
    %631 = vst.msk [vmem:[%s6 + $0x80] sm:$0xff] %vm614, %v581
    %632 = vst.msk [vmem:[%s6 + $0x88] sm:$0xff] %vm614, %v582
    %633 = vst.msk [vmem:[%s6 + $0x90] sm:$0xff] %vm614, %v583
    %634 = vst.msk [vmem:[%s6 + $0x98] sm:$0xff] %vm614, %v584
    %635 = vst.msk [vmem:[%s6 + $0xa0] sm:$0xff] %vm614, %v585
    %636 = vst.msk [vmem:[%s6 + $0xa8] sm:$0xff] %vm614, %v586
    %637 = vst.msk [vmem:[%s6 + $0xb0] sm:$0xff] %vm614, %v587
    %638 = vst.msk [vmem:[%s6 + $0xb8] sm:$0xff] %vm614, %v588
    %639 = vst.msk [vmem:[%s6 + $0xc0] sm:$0xff] %vm614, %v589
    %640 = vst.msk [vmem:[%s6 + $0xc8] sm:$0xff] %vm614, %v590
    %641 = vst.msk [vmem:[%s6 + $0xd0] sm:$0xff] %vm614, %v591
    %642 = vst.msk [vmem:[%s6 + $0xd8] sm:$0xff] %vm614, %v592
    %643 = vst.msk [vmem:[%s6 + $0xe0] sm:$0xff] %vm614, %v593
    %644 = vst.msk [vmem:[%s6 + $0xe8] sm:$0xff] %vm614, %v594
    %645 = vst.msk [vmem:[%s6 + $0xf0] sm:$0xff] %vm614, %v595
    %646 = vst.msk [vmem:[%s6 + $0xf8] sm:$0xff] %vm614, %v596
    %647 = vst.msk [vmem:[%s6 + $0x100] sm:$0xff] %vm614, %v597
    %648 = vst.msk [vmem:[%s6 + $0x108] sm:$0xff] %vm614, %v598
    %649 = vst.msk [vmem:[%s6 + $0x110] sm:$0xff] %vm614, %v599
    %650 = vst.msk [vmem:[%s6 + $0x118] sm:$0xff] %vm614, %v600
    %651 = vst.msk [vmem:[%s6 + $0x120] sm:$0xff] %vm614, %v601
    %652 = vst.msk [vmem:[%s6 + $0x128] sm:$0xff] %vm614, %v602
    %653 = vst.msk [vmem:[%s6 + $0x130] sm:$0xff] %vm614, %v603
    %654 = vst.msk [vmem:[%s6 + $0x138] sm:$0xff] %vm614, %v604
    %655 = vst.msk [vmem:[%s6 + $0x140] sm:$0xff] %vm614, %v605
    %656 = vst.msk [vmem:[%s6 + $0x148] sm:$0xff] %vm614, %v606
    %657 = vst.msk [vmem:[%s6 + $0x150] sm:$0xff] %vm614, %v607
    %658 = vst.msk [vmem:[%s6 + $0x158] sm:$0xff] %vm614, %v608
    %659 = vst.msk [vmem:[%s6 + $0x160] sm:$0xff] %vm614, %v609
    %660 = vst.msk [vmem:[%s6 + $0x168] sm:$0xff] %vm614, %v610
    %661 = vst.msk [vmem:[%s6 + $0x170] sm:$0xff] %vm614, %v611
    %662 = vst.msk [vmem:[%s6 + $0x178] sm:$0xff] %vm614, %v612
    %663 = vst.msk [vmem:[%s6 + $0x180] sm:$0xff] %vm614, %v613
    // Predicated region
    $region26: #{_patch_embed_forward.2} parent=1 // pred_check
      _
    $region27: #{_patch_embed_forward.2} parent=1 // pred_check_branch
      %665 = sbr.rel (0) target = $region29
    $region28: #{_patch_embed_forward.2} parent=1 // pred_region
      _
    $region29: #{_patch_embed_forward.2} parent=1 // pred_fallthru
      _
    // Predicated region
    $region30: #{_patch_embed_forward.2} parent=1 // pred_check
      _
    $region31: #{_patch_embed_forward.2} parent=1 // pred_check_branch
      %667 = sbr.rel (0) target = $region33
    $region32: #{_patch_embed_forward.2} parent=1 // pred_region
      _
    $region33: #{_patch_embed_forward.2} parent=1 // pred_fallthru
      _

</llo_original>
